<compile_context>
chip_gen: v6e
topology: v6e:2x2x1
jax: 0.10.0
libtpu: 0.0.40
codegen_flags: <defaults>
</compile_context>

<pallas_src>
import jax
import jax.numpy as jnp
from jax.experimental import pallas as pl
from jax.experimental.pallas import tpu as pltpu


def _mmd_kernel(alpha_ref, n_ref,
                xi_ref, xj_ref, yi_ref, yj_ref,
                sqxi_ref, sqyi_ref, sqxj_ref, sqyj_ref,
                out_ref, acc_ref):
    j = pl.program_id(1)

    @pl.when(j == 0)
    def _():
        acc_ref[...] = jnp.zeros_like(acc_ref)

    neg_alpha = -alpha_ref[0]
    n = n_ref[0]

    xi = xi_ref[...]
    xj = xj_ref[...]
    yi = yi_ref[...]
    yj = yj_ref[...]

    # Contract the feature dim of both operands -> (TB, TB) pairwise dots (MXU).
    dn = (((1,), (1,)), ((), ()))
    xx = jax.lax.dot_general(xi, xj, dn, preferred_element_type=jnp.float32)
    yy = jax.lax.dot_general(yi, yj, dn, preferred_element_type=jnp.float32)
    xy = jax.lax.dot_general(xi, yj, dn, preferred_element_type=jnp.float32)

    sqxi = sqxi_ref[...]   # (TB, 1)  ||x_i||^2 for the i row-tile
    sqyi = sqyi_ref[...]   # (TB, 1)
    sqxj = sqxj_ref[...]   # (1, TB)  ||x_j||^2 for the j col-tile
    sqyj = sqyj_ref[...]   # (1, TB)

    K = jnp.exp(neg_alpha * (sqxi + sqxj - 2.0 * xx))
    L = jnp.exp(neg_alpha * (sqyi + sqyj - 2.0 * yy))
    P = jnp.exp(neg_alpha * (sqxi + sqyj - 2.0 * xy))
    contrib = K + L - 2.0 * P

    # Mask out zero-padded rows / columns (padding only exists for alignment).
    ti, tj = contrib.shape
    row_ids = pl.program_id(0) * ti + jax.lax.broadcasted_iota(jnp.int32, (ti, tj), 0)
    col_ids = j * tj + jax.lax.broadcasted_iota(jnp.int32, (ti, tj), 1)
    contrib = jnp.where((row_ids < n) & (col_ids < n), contrib, 0.0)

    # Lane-wise partial sums (cross-sublane reduce); the final lane reduction
    # is a tiny O(grid*TB) sum done once in the wrapper.
    acc_ref[...] += jnp.sum(contrib, axis=0, keepdims=True)

    @pl.when(j == pl.num_programs(1) - 1)
    def _():
        out_ref[...] = acc_ref[...].reshape(out_ref.shape)


def _round_up(v, m):
    return ((v + m - 1) // m) * m


def mmd_loss_pallas(x, y, alpha):
    """Pallas equivalent of MMDLoss(alpha).forward(x, y)."""
    n, d = x.shape
    assert y.shape == (n, d), "MMDLoss requires x and y of identical shape"

    tb = 128 if n >= 128 else _round_up(n, 8)
    n_pad = _round_up(n, tb)
    d_pad = _round_up(d, 128)

    x_p = jnp.zeros((n_pad, d_pad), x.dtype).at[:n, :d].set(x)
    y_p = jnp.zeros((n_pad, d_pad), y.dtype).at[:n, :d].set(y)

    # Squared row norms, precomputed once (streamed to the kernel in both
    # column and row layouts so no in-kernel transpose is needed).
    sqx = jnp.sum(x_p.astype(jnp.float32) ** 2, axis=1)   # (N_pad,)
    sqy = jnp.sum(y_p.astype(jnp.float32) ** 2, axis=1)
    sqx_col, sqy_col = sqx[:, None], sqy[:, None]         # (N_pad, 1)
    sqx_row, sqy_row = sqx[None, :], sqy[None, :]         # (1, N_pad)

    g = n_pad // tb
    alpha_arr = jnp.asarray([alpha], dtype=jnp.float32)
    n_arr = jnp.asarray([n], dtype=jnp.int32)

    i_map = lambda i, j: (i, 0)
    j_map = lambda i, j: (j, 0)

    partials = pl.pallas_call(
        _mmd_kernel,
        out_shape=jax.ShapeDtypeStruct((g, 1, tb), jnp.float32),
        grid=(g, g),
        in_specs=[
            pl.BlockSpec(memory_space=pltpu.SMEM),          # alpha
            pl.BlockSpec(memory_space=pltpu.SMEM),          # true N (mask bound)
            pl.BlockSpec((tb, d_pad), i_map),               # x rows, i tile
            pl.BlockSpec((tb, d_pad), j_map),               # x rows, j tile
            pl.BlockSpec((tb, d_pad), i_map),               # y rows, i tile
            pl.BlockSpec((tb, d_pad), j_map),               # y rows, j tile
            pl.BlockSpec((tb, 1), i_map),                   # ||x||^2 column layout
            pl.BlockSpec((tb, 1), i_map),                   # ||y||^2 column layout
            pl.BlockSpec((1, tb), lambda i, j: (0, j)),     # ||x||^2 row layout
            pl.BlockSpec((1, tb), lambda i, j: (0, j)),     # ||y||^2 row layout
        ],
        out_specs=pl.BlockSpec((1, 1, tb), lambda i, j: (i, 0, 0)),
        scratch_shapes=[pltpu.VMEM((1, tb), jnp.float32)],
        compiler_params=pltpu.CompilerParams(
            dimension_semantics=("parallel", "arbitrary"),
            vmem_limit_bytes=32 * 1024 * 1024,
        ),
    )(alpha_arr, n_arr, x_p, x_p, y_p, y_p,
      sqx_col, sqy_col, sqx_row, sqy_row)

    # Tiny final reduction over the per-row-tile lane partials (plain JAX glue).
    return jnp.sum(partials)


def _mmd_ref(x, y, alpha):
    xx = x @ x.T
    yy = y @ y.T
    xy = x @ y.T
    rx = jnp.broadcast_to(jnp.diag(xx)[None, :], xx.shape)
    ry = jnp.broadcast_to(jnp.diag(yy)[None, :], yy.shape)
    K = jnp.exp(-alpha * (rx.T + rx - 2.0 * xx))
    L = jnp.exp(-alpha * (ry.T + ry - 2.0 * yy))
    P = jnp.exp(-alpha * (rx.T + ry - 2.0 * xy))
    return jnp.sum(K) + jnp.sum(L) - 2.0 * jnp.sum(P)


if __name__ == "__main__":
    key = jax.random.PRNGKey(0)
    k1, k2, k3, k4 = jax.random.split(key, 4)

    # Primary small case: batch=8, hidden=32 (single tile, no padding on N).
    alpha = 0.05
    x = jax.random.normal(k1, (8, 32), dtype=jnp.float32)
    y = jax.random.normal(k2, (8, 32), dtype=jnp.float32) + 0.5

    loss = mmd_loss_pallas(x, y, alpha)
    jax.block_until_ready(loss)
    ref = _mmd_ref(x, y, alpha)
    assert jnp.allclose(loss, ref, rtol=1e-4, atol=1e-4), (loss, ref)

    # Second case exercising the multi-tile grid, accumulator and pad masking.
    alpha2 = 0.02
    x2 = jax.random.normal(k3, (200, 48), dtype=jnp.float32)
    y2 = jax.random.normal(k4, (200, 48), dtype=jnp.float32) * 0.9 + 0.3
    loss2 = mmd_loss_pallas(x2, y2, alpha2)
    jax.block_until_ready(loss2)
    ref2 = _mmd_ref(x2, y2, alpha2)
    assert jnp.allclose(loss2, ref2, rtol=2e-3, atol=1e-2), (loss2, ref2)

    print("KERNEL_OK")
</pallas_src>

<mosaic_0001>
module attributes {stable_mosaic.version = 11 : i64} {
  func.func @_mmd_kernel(%arg0: i32, %arg1: i32, %arg2: memref<1xf32, #tpu.memory_space<smem>>, %arg3: memref<1xi32, #tpu.memory_space<smem>>, %arg4: memref<8x128xf32, #tpu.memory_space<vmem>>, %arg5: memref<8x128xf32, #tpu.memory_space<vmem>>, %arg6: memref<8x128xf32, #tpu.memory_space<vmem>>, %arg7: memref<8x128xf32, #tpu.memory_space<vmem>>, %arg8: memref<8x1xf32, #tpu.memory_space<vmem>>, %arg9: memref<8x1xf32, #tpu.memory_space<vmem>>, %arg10: memref<1x8xf32, #tpu.memory_space<vmem>>, %arg11: memref<1x8xf32, #tpu.memory_space<vmem>>, %arg12: memref<1x1x8xf32, #tpu.memory_space<vmem>>, %arg13: memref<1x8xf32, #tpu.memory_space<vmem>>) attributes {dimension_semantics = [#tpu.dimension_semantics<parallel>, #tpu.dimension_semantics<arbitrary>], iteration_bounds = array<i64: 1, 1>, scalar_prefetch = 0 : i64, scratch_operands = 1 : i64, tpu.core_type = #tpu.core_type<tc>, window_params = [{transform_indices = @transform_0, window_bounds = array<i64: 1>}, {transform_indices = @transform_1, window_bounds = array<i64: 1>}, {transform_indices = @transform_2, window_bounds = array<i64: 8, 128>}, {transform_indices = @transform_3, window_bounds = array<i64: 8, 128>}, {transform_indices = @transform_4, window_bounds = array<i64: 8, 128>}, {transform_indices = @transform_5, window_bounds = array<i64: 8, 128>}, {transform_indices = @transform_6, window_bounds = array<i64: 8, 1>}, {transform_indices = @transform_7, window_bounds = array<i64: 8, 1>}, {transform_indices = @transform_8, window_bounds = array<i64: 1, 8>}, {transform_indices = @transform_9, window_bounds = array<i64: 1, 8>}, {transform_indices = @transform_10, window_bounds = array<i64: 1, 1, 8>}]} {
    %c0_i32 = arith.constant 0 : i32
    %0 = arith.cmpi eq, %arg1, %c0_i32 : i32
    %1 = arith.extui %0 : i1 to i32
    %c0_i32_0 = arith.constant 0 : i32
    %2 = arith.cmpi ne, %1, %c0_i32_0 : i32
    scf.if %2 {
      %cst_34 = arith.constant 0.000000e+00 : f32
      %71 = vector.broadcast %cst_34 : f32 to vector<1x8xf32>
      %c0_35 = arith.constant 0 : index
      %c0_36 = arith.constant 0 : index
      %72 = vector.load %arg13[%c0_35, %c0_36] : memref<1x8xf32, #tpu.memory_space<vmem>>, vector<1x8xf32>
      tpu.vector_store %arg13[%c0_35, %c0_36], %71 {strides = array<i32>} : memref<1x8xf32, #tpu.memory_space<vmem>>, vector<1x8xf32>,
    } else {
    }
    %c0 = arith.constant 0 : index
    %3 = memref.load %arg2[%c0] : memref<1xf32, #tpu.memory_space<smem>>
    %cst = arith.constant 0.000000e+00 : f32
    %4 = arith.subf %cst, %3 : f32
    %c0_1 = arith.constant 0 : index
    %5 = memref.load %arg3[%c0_1] : memref<1xi32, #tpu.memory_space<smem>>
    %c0_2 = arith.constant 0 : index
    %c0_3 = arith.constant 0 : index
    %6 = vector.load %arg4[%c0_2, %c0_3] : memref<8x128xf32, #tpu.memory_space<vmem>>, vector<8x128xf32>
    %c0_4 = arith.constant 0 : index
    %c0_5 = arith.constant 0 : index
    %7 = vector.load %arg5[%c0_4, %c0_5] : memref<8x128xf32, #tpu.memory_space<vmem>>, vector<8x128xf32>
    %c0_6 = arith.constant 0 : index
    %c0_7 = arith.constant 0 : index
    %8 = vector.load %arg6[%c0_6, %c0_7] : memref<8x128xf32, #tpu.memory_space<vmem>>, vector<8x128xf32>
    %c0_8 = arith.constant 0 : index
    %c0_9 = arith.constant 0 : index
    %9 = vector.load %arg7[%c0_8, %c0_9] : memref<8x128xf32, #tpu.memory_space<vmem>>, vector<8x128xf32>
    %cst_10 = arith.constant dense<0.000000e+00> : vector<8x8xf32>
    %10 = tpu.matmul %6, %7, %cst_10 {dimension_numbers = #tpu.dot_dimension_numbers<[1], [1], [0], [0], [0, 0, 1, 0], [], []>} : vector<8x128xf32>, vector<8x128xf32>, vector<8x8xf32> -> vector<8x8xf32>
    %cst_11 = arith.constant dense<0.000000e+00> : vector<8x8xf32>
    %11 = tpu.matmul %8, %9, %cst_11 {dimension_numbers = #tpu.dot_dimension_numbers<[1], [1], [0], [0], [0, 0, 1, 0], [], []>} : vector<8x128xf32>, vector<8x128xf32>, vector<8x8xf32> -> vector<8x8xf32>
    %cst_12 = arith.constant dense<0.000000e+00> : vector<8x8xf32>
    %12 = tpu.matmul %6, %9, %cst_12 {dimension_numbers = #tpu.dot_dimension_numbers<[1], [1], [0], [0], [0, 0, 1, 0], [], []>} : vector<8x128xf32>, vector<8x128xf32>, vector<8x8xf32> -> vector<8x8xf32>
    %c0_13 = arith.constant 0 : index
    %c0_14 = arith.constant 0 : index
    %13 = vector.load %arg8[%c0_13, %c0_14] : memref<8x1xf32, #tpu.memory_space<vmem>>, vector<8x1xf32>
    %c0_15 = arith.constant 0 : index
    %c0_16 = arith.constant 0 : index
    %14 = vector.load %arg9[%c0_15, %c0_16] : memref<8x1xf32, #tpu.memory_space<vmem>>, vector<8x1xf32>
    %c0_17 = arith.constant 0 : index
    %c0_18 = arith.constant 0 : index
    %15 = vector.load %arg10[%c0_17, %c0_18] : memref<1x8xf32, #tpu.memory_space<vmem>>, vector<1x8xf32>
    %c0_19 = arith.constant 0 : index
    %c0_20 = arith.constant 0 : index
    %16 = vector.load %arg11[%c0_19, %c0_20] : memref<1x8xf32, #tpu.memory_space<vmem>>, vector<1x8xf32>
    %17 = vector.broadcast %13 : vector<8x1xf32> to vector<8x8xf32>
    %18 = vector.broadcast %15 : vector<1x8xf32> to vector<8x8xf32>
    %19 = arith.addf %17, %18 : vector<8x8xf32>
    %cst_21 = arith.constant 2.000000e+00 : f32
    %20 = vector.broadcast %cst_21 : f32 to vector<8x8xf32>
    %21 = arith.mulf %20, %10 : vector<8x8xf32>
    %22 = arith.subf %19, %21 : vector<8x8xf32>
    %23 = vector.broadcast %4 : f32 to vector<8x8xf32>
    %24 = arith.mulf %23, %22 : vector<8x8xf32>
    %25 = math.exp %24 : vector<8x8xf32>
    %26 = vector.broadcast %14 : vector<8x1xf32> to vector<8x8xf32>
    %27 = vector.broadcast %16 : vector<1x8xf32> to vector<8x8xf32>
    %28 = arith.addf %26, %27 : vector<8x8xf32>
    %cst_22 = arith.constant 2.000000e+00 : f32
    %29 = vector.broadcast %cst_22 : f32 to vector<8x8xf32>
    %30 = arith.mulf %29, %11 : vector<8x8xf32>
    %31 = arith.subf %28, %30 : vector<8x8xf32>
    %32 = vector.broadcast %4 : f32 to vector<8x8xf32>
    %33 = arith.mulf %32, %31 : vector<8x8xf32>
    %34 = math.exp %33 : vector<8x8xf32>
    %35 = vector.broadcast %13 : vector<8x1xf32> to vector<8x8xf32>
    %36 = vector.broadcast %16 : vector<1x8xf32> to vector<8x8xf32>
    %37 = arith.addf %35, %36 : vector<8x8xf32>
    %cst_23 = arith.constant 2.000000e+00 : f32
    %38 = vector.broadcast %cst_23 : f32 to vector<8x8xf32>
    %39 = arith.mulf %38, %12 : vector<8x8xf32>
    %40 = arith.subf %37, %39 : vector<8x8xf32>
    %41 = vector.broadcast %4 : f32 to vector<8x8xf32>
    %42 = arith.mulf %41, %40 : vector<8x8xf32>
    %43 = math.exp %42 : vector<8x8xf32>
    %44 = arith.addf %25, %34 : vector<8x8xf32>
    %cst_24 = arith.constant 2.000000e+00 : f32
    %45 = vector.broadcast %cst_24 : f32 to vector<8x8xf32>
    %46 = arith.mulf %45, %43 : vector<8x8xf32>
    %47 = arith.subf %44, %46 : vector<8x8xf32>
    %c8_i32 = arith.constant 8 : i32
    %48 = arith.muli %arg0, %c8_i32 : i32
    %49 = tpu.iota {dimensions = array<i32: 0>} : vector<8x8xi32>
    %50 = vector.broadcast %48 : i32 to vector<8x8xi32>
    %51 = arith.addi %50, %49 : vector<8x8xi32>
    %c8_i32_25 = arith.constant 8 : i32
    %52 = arith.muli %arg1, %c8_i32_25 : i32
    %53 = tpu.iota {dimensions = array<i32: 1>} : vector<8x8xi32>
    %54 = vector.broadcast %52 : i32 to vector<8x8xi32>
    %55 = arith.addi %54, %53 : vector<8x8xi32>
    %56 = vector.broadcast %5 : i32 to vector<8x8xi32>
    %57 = arith.cmpi slt, %51, %56 : vector<8x8xi32>
    %58 = vector.broadcast %5 : i32 to vector<8x8xi32>
    %59 = arith.cmpi slt, %55, %58 : vector<8x8xi32>
    %60 = arith.andi %57, %59 : vector<8x8xi1>
    %cst_26 = arith.constant 0.000000e+00 : f32
    %61 = vector.broadcast %cst_26 : f32 to vector<8x8xf32>
    %62 = arith.select %60, %47, %61 : vector<8x8xi1>, vector<8x8xf32>
    %c0_27 = arith.constant 0 : index
    %c0_28 = arith.constant 0 : index
    %63 = vector.load %arg13[%c0_27, %c0_28] : memref<1x8xf32, #tpu.memory_space<vmem>>, vector<1x8xf32>
    %cst_29 = arith.constant dense<0.000000e+00> : vector<8xf32>
    %64 = vector.multi_reduction <add>, %62, %cst_29 [0] : vector<8x8xf32> to vector<8xf32>
    %65 = vector.shape_cast %64 : vector<8xf32> to vector<1x8xf32>
    %66 = arith.addf %63, %65 : vector<1x8xf32>
    %c0_30 = arith.constant 0 : index
    %c0_31 = arith.constant 0 : index
    %67 = vector.load %arg13[%c0_30, %c0_31] : memref<1x8xf32, #tpu.memory_space<vmem>>, vector<1x8xf32>
    tpu.vector_store %arg13[%c0_30, %c0_31], %66 {strides = array<i32>} : memref<1x8xf32, #tpu.memory_space<vmem>>, vector<1x8xf32>,
    %c0_i32_32 = arith.constant 0 : i32
    %68 = arith.cmpi eq, %arg1, %c0_i32_32 : i32
    %69 = arith.extui %68 : i1 to i32
    %c0_i32_33 = arith.constant 0 : i32
    %70 = arith.cmpi ne, %69, %c0_i32_33 : i32
    scf.if %70 {
      %c0_34 = arith.constant 0 : index
      %c0_35 = arith.constant 0 : index
      %71 = vector.load %arg13[%c0_34, %c0_35] : memref<1x8xf32, #tpu.memory_space<vmem>>, vector<1x8xf32>
      %72 = vector.shape_cast %71 : vector<1x8xf32> to vector<1x1x8xf32>
      %c0_36 = arith.constant 0 : index
      %c0_37 = arith.constant 0 : index
      %c0_38 = arith.constant 0 : index
      %73 = vector.load %arg12[%c0_36, %c0_37, %c0_38] : memref<1x1x8xf32, #tpu.memory_space<vmem>>, vector<1x1x8xf32>
      tpu.vector_store %arg12[%c0_36, %c0_37, %c0_38], %72 {strides = array<i32>} : memref<1x1x8xf32, #tpu.memory_space<vmem>>, vector<1x1x8xf32>,
    } else {
    }
    return
  }
  func.func @transform_0(%arg0: i32, %arg1: i32) -> i32 {
    %c0_i32 = arith.constant 0 : i32
    %c0_i32_0 = arith.constant 0 : i32
    return %c0_i32 : i32
  }
  func.func @transform_1(%arg0: i32, %arg1: i32) -> i32 {
    %c0_i32 = arith.constant 0 : i32
    %c0_i32_0 = arith.constant 0 : i32
    return %c0_i32 : i32
  }
  func.func @transform_2(%arg0: i32, %arg1: i32) -> (i32, i32) {
    %c0_i32 = arith.constant 0 : i32
    %c0_i32_0 = arith.constant 0 : i32
    return %arg0, %c0_i32 : i32, i32
  }
  func.func @transform_3(%arg0: i32, %arg1: i32) -> (i32, i32) {
    %c0_i32 = arith.constant 0 : i32
    %c0_i32_0 = arith.constant 0 : i32
    return %arg1, %c0_i32 : i32, i32
  }
  func.func @transform_4(%arg0: i32, %arg1: i32) -> (i32, i32) {
    %c0_i32 = arith.constant 0 : i32
    %c0_i32_0 = arith.constant 0 : i32
    return %arg0, %c0_i32 : i32, i32
  }
  func.func @transform_5(%arg0: i32, %arg1: i32) -> (i32, i32) {
    %c0_i32 = arith.constant 0 : i32
    %c0_i32_0 = arith.constant 0 : i32
    return %arg1, %c0_i32 : i32, i32
  }
  func.func @transform_6(%arg0: i32, %arg1: i32) -> (i32, i32) {
    %c0_i32 = arith.constant 0 : i32
    %c0_i32_0 = arith.constant 0 : i32
    return %arg0, %c0_i32 : i32, i32
  }
  func.func @transform_7(%arg0: i32, %arg1: i32) -> (i32, i32) {
    %c0_i32 = arith.constant 0 : i32
    %c0_i32_0 = arith.constant 0 : i32
    return %arg0, %c0_i32 : i32, i32
  }
  func.func @transform_8(%arg0: i32, %arg1: i32) -> (i32, i32) {
    %c0_i32 = arith.constant 0 : i32
    %c0_i32_0 = arith.constant 0 : i32
    return %c0_i32, %arg1 : i32, i32
  }
  func.func @transform_9(%arg0: i32, %arg1: i32) -> (i32, i32) {
    %c0_i32 = arith.constant 0 : i32
    %c0_i32_0 = arith.constant 0 : i32
    return %c0_i32, %arg1 : i32, i32
  }
  func.func @transform_10(%arg0: i32, %arg1: i32) -> (i32, i32, i32) {
    %c0_i32 = arith.constant 0 : i32
    %c0_i32_0 = arith.constant 0 : i32
    %c0_i32_1 = arith.constant 0 : i32
    return %arg0, %c0_i32, %c0_i32_0 : i32, i32, i32
  }
}

</mosaic_0001>

<llo_original>
// kernel: tpu_custom_call.1
$region0: #{tpu_custom_call.1}
  #allocation0 [shape = 'u32[]', space=smem, size = 0x4, offset = 0x4, fixed_abs, tag = 'smem constant byte address 0x4 - core index']
  #allocation1 [shape = 'u32[144,128]{1,0:T(1,128)}', space=vmem, size = 0x12000, scoped, tag = 'internal scratch']
  #allocation2 [shape = 'f32[1,8]{1,0:T(1,128)}', space=vmem, size = 0x200, scoped, tag = 'scratch operand']
  #allocation3 [shape = 'f32[1]{0:T(128)S(6)}', space=smem, size = 0x200, scoped, tag = 'scoped memory for tpu_custom_call.1']
  #allocation4 [shape = 's32[1]{0:T(128)S(6)}', space=smem, size = 0x200, scoped, tag = 'scoped memory for tpu_custom_call.1']
  %s0 = inlined_call_operand.<no memory space> [shape: f32[1], index: 0, kind: input, shape index: {}]
  %s1 = inlined_call_operand.<no memory space> [shape: s32[1], index: 1, kind: input, shape index: {}]
  %s2 = inlined_call_operand.vmem [shape: f32[8,128], index: 2, kind: input, shape index: {}]
  %s3 = inlined_call_operand.vmem [shape: f32[8,128], index: 3, kind: input, shape index: {}]
  %s4 = inlined_call_operand.vmem [shape: f32[8,128], index: 4, kind: input, shape index: {}]
  %s5 = inlined_call_operand.hbm [shape: f32[8,128], index: 5, kind: input, shape index: {}]
  %s6 = inlined_call_operand.vmem [shape: f32[8,1], index: 6, kind: input, shape index: {}]
  %s7 = inlined_call_operand.vmem [shape: f32[8,1], index: 7, kind: input, shape index: {}]
  %s8 = inlined_call_operand.vmem [shape: f32[1,8], index: 8, kind: input, shape index: {}]
  %s9 = inlined_call_operand.vmem [shape: f32[1,8], index: 9, kind: input, shape index: {}]
  %s10 = inlined_call_operand.hbm [shape: f32[1,1,8], index: 10, kind: output, shape index: {}]
  %s11 = sld [smem:[#allocation0]]
  $region62: #{tpu_custom_call.1} parent=0
    _
  %s13 = ssub.s32 1, %s11
  %s14 = scalar_select 0, %s13, %s11
  %15 = sst [smem:[#allocation3]] %s0
  %16 = sst [smem:[#allocation4]] %s1
  $region1: #{tpu_custom_call.1} parent=0
    #allocation5 [shape = 'u8[4096]{0}', space=vmem, size = 0x1000, scoped, tag = 'input window, operand 5, single buffered']
    #allocation6 [shape = 's32[1]{0}', space=sflag, size = 0x4, scoped, tag = 'scoped memory for tpu_custom_call.1']
    #allocation7 [shape = 's32[1]{0}', space=sflag, size = 0x4, scoped, tag = 'scoped memory for tpu_custom_call.1']
    #allocation8 [shape = 'u8[512]{0}', space=vmem, size = 0x400, scoped, tag = 'output window, operand 0, single buffered']
    %17 = vsyncpa [#allocation6], 0
    %18 = vsyncpa [#allocation7], 0
    // Predicated region
    $region2: #{tpu_custom_call.1} parent=1 // pred_check
      _
    $region3: #{tpu_custom_call.1} parent=1 // pred_check_branch
      %20 = sbr.rel (0) target = $region5
    $region4: #{tpu_custom_call.1} parent=1 // pred_region
      _
    $region5: #{tpu_custom_call.1} parent=1 // pred_fallthru
      _
    // Predicated region
    $region6: #{tpu_custom_call.1} parent=1 // pred_check
      _
    $region7: #{tpu_custom_call.1} parent=1 // pred_check_branch
      %22 = sbr.rel (0) target = $region9
    $region8: #{tpu_custom_call.1} parent=1 // pred_region
      _
    $region9: #{tpu_custom_call.1} parent=1 // pred_fallthru
      _
    // Predicated region
    $region10: #{tpu_custom_call.1} parent=1 // pred_check
      _
    $region11: #{tpu_custom_call.1} parent=1 // pred_check_branch
      %24 = sbr.rel (0) target = $region13
    $region12: #{tpu_custom_call.1} parent=1 // pred_region
      _
    $region13: #{tpu_custom_call.1} parent=1 // pred_fallthru
      _
    // Predicated region
    $region14: #{tpu_custom_call.1} parent=1 // pred_check
      _
    $region15: #{tpu_custom_call.1} parent=1 // pred_check_branch
      %26 = sbr.rel (0) target = $region17
    $region16: #{tpu_custom_call.1} parent=1 // pred_region
      _
    $region17: #{tpu_custom_call.1} parent=1 // pred_fallthru
      _
    // Predicated region
    $region18: #{tpu_custom_call.1} parent=1 // pred_check
      _
    $region19: #{tpu_custom_call.1} parent=1 // pred_check_branch
      %28 = sbr.rel (0) target = $region21
    $region20: #{tpu_custom_call.1} parent=1 // pred_region
      _
    $region21: #{tpu_custom_call.1} parent=1 // pred_fallthru
      _
    // Predicated region
    $region22: #{tpu_custom_call.1} parent=1 // pred_check
      _
    $region23: #{tpu_custom_call.1} parent=1 // pred_check_branch
      %30 = sbr.rel (0) target = $region25
    $region24: #{tpu_custom_call.1} parent=1 // pred_region
      %s32 = ssub.s32 128, 128
      %33 = vsyncadd [#allocation6], %s32
      %s35 = sshll.u32 [#allocation5], 4
      %s36 = int_to_ptr.vmem [resolvable:$true] %s35
      %38 = dma.hbm_to_vmem [thread:$0]  %s5, 128, %s36, [#allocation6]
    $region25: #{tpu_custom_call.1} parent=1 // pred_fallthru
      _
    // Predicated region
    $region26: #{tpu_custom_call.1} parent=1 // pred_check
      _
    $region27: #{tpu_custom_call.1} parent=1 // pred_check_branch
      %40 = sbr.rel (0) target = $region29
    $region28: #{tpu_custom_call.1} parent=1 // pred_region
      _
    $region29: #{tpu_custom_call.1} parent=1 // pred_fallthru
      _
    // Predicated region
    $region30: #{tpu_custom_call.1} parent=1 // pred_check
      _
    $region31: #{tpu_custom_call.1} parent=1 // pred_check_branch
      %42 = sbr.rel (0) target = $region33
    $region32: #{tpu_custom_call.1} parent=1 // pred_region
      _
    $region33: #{tpu_custom_call.1} parent=1 // pred_fallthru
      _
    // Predicated region
    $region34: #{tpu_custom_call.1} parent=1 // pred_check
      _
    $region35: #{tpu_custom_call.1} parent=1 // pred_check_branch
      %44 = sbr.rel (0) target = $region37
    $region36: #{tpu_custom_call.1} parent=1 // pred_region
      _
    $region37: #{tpu_custom_call.1} parent=1 // pred_fallthru
      _
    // Predicated region
    $region38: #{tpu_custom_call.1} parent=1 // pred_check
      _
    $region39: #{tpu_custom_call.1} parent=1 // pred_check_branch
      %46 = sbr.rel (0) target = $region41
    $region40: #{tpu_custom_call.1} parent=1 // pred_region
      _
    $region41: #{tpu_custom_call.1} parent=1 // pred_fallthru
      _
    // Predicated region
    $region42: #{tpu_custom_call.1} parent=1 // pred_check
      _
    $region43: #{tpu_custom_call.1} parent=1 // pred_check_branch
      %48 = sbr.rel (0) target = $region45
    $region44: #{tpu_custom_call.1} parent=1 // pred_region
      %49 = dma.done [#allocation6], 128
    $region45: #{tpu_custom_call.1} parent=1 // pred_fallthru
      _
    %p50 = scmp.eq.s32.totalorder 0, 0
    // Predicated region
    $region46: #{tpu_custom_call.1} parent=1 // pred_check
      %p51 = pneg %p50
    $region47: #{tpu_custom_call.1} parent=1 // pred_check_branch
      %53 = sbr.rel (%p51) target = $region49
    $region48: #{tpu_custom_call.1} parent=1 // pred_region
      %vm54 = vcmask 57344
      %55 = vst.msk [vmem:[#allocation2] sm:$0x1] %vm54, 0.0
    $region49: #{tpu_custom_call.1} parent=1 // pred_fallthru
      _
    %s56 = sld [smem:[#allocation3]]
    %s57 = ssub.f32 0.0, %s56
    %s58 = sld [smem:[#allocation4]]
    %v59 = vld [vmem:[%s2] sm:$0xff]
    %v60 = vld [vmem:[%s3] sm:$0xff]
    %v61 = vld [vmem:[%s4] sm:$0xff]
    %v62 = vld [vmem:[#allocation5] sm:$0xff]
    %63 = vmatprep.subr.mxu0 0.0
    %64 = vmatpush1.xpose.msra.mxu0 0.0
    %65 = vmatprep.subr.mxu0 0.0
    %66 = vmatpush1.xpose.msra.mxu0 0.0
    %67 = vmatprep.subr.mxu0 0.0
    %68 = vmatpush1.xpose.msra.mxu0 0.0
    %69 = vmatprep.subr.mxu0 0.0
    %70 = vmatpush1.xpose.msra.mxu0 0.0
    %71 = vmatprep.subr.mxu0 0.0
    %72 = vmatpush1.xpose.msra.mxu0 0.0
    %73 = vmatprep.subr.mxu0 0.0
    %74 = vmatpush1.xpose.msra.mxu0 0.0
    %75 = vmatprep.subr.mxu0 0.0
    %76 = vmatpush1.xpose.msra.mxu0 0.0
    %77 = vmatprep.subr.mxu0 0.0
    %78 = vmatpush1.xpose.msra.mxu0 0.0
    %79 = vmatprep.subr.mxu0 0.0
    %80 = vmatpush1.xpose.msra.mxu0 0.0
    %81 = vmatprep.subr.mxu0 0.0
    %82 = vmatpush1.xpose.msra.mxu0 0.0
    %83 = vmatprep.subr.mxu0 0.0
    %84 = vmatpush1.xpose.msra.mxu0 0.0
    %85 = vmatprep.subr.mxu0 0.0
    %86 = vmatpush1.xpose.msra.mxu0 0.0
    %87 = vmatprep.subr.mxu0 0.0
    %88 = vmatpush1.xpose.msra.mxu0 0.0
    %89 = vmatprep.subr.mxu0 0.0
    %90 = vmatpush1.xpose.msra.mxu0 0.0
    %91 = vmatprep.subr.mxu0 0.0
    %92 = vmatpush1.xpose.msra.mxu0 0.0
    %93 = vmatprep.subr.mxu0 0.0
    %94 = vmatpush1.xpose.msra.mxu0 %v60
    %95 = vmatprep.subr.mxu0 0.0
    %96 = vmatpush2.xpose.msra.mxu0 0.0
    %97 = vmatprep.subr.mxu0 0.0
    %98 = vmatpush2.xpose.msra.mxu0 0.0
    %99 = vmatprep.subr.mxu0 0.0
    %100 = vmatpush2.xpose.msra.mxu0 0.0
    %101 = vmatprep.subr.mxu0 0.0
    %102 = vmatpush2.xpose.msra.mxu0 0.0
    %103 = vmatprep.subr.mxu0 0.0
    %104 = vmatpush2.xpose.msra.mxu0 0.0
    %105 = vmatprep.subr.mxu0 0.0
    %106 = vmatpush2.xpose.msra.mxu0 0.0
    %107 = vmatprep.subr.mxu0 0.0
    %108 = vmatpush2.xpose.msra.mxu0 0.0
    %109 = vmatprep.subr.mxu0 0.0
    %110 = vmatpush2.xpose.msra.mxu0 0.0
    %111 = vmatprep.subr.mxu0 0.0
    %112 = vmatpush2.xpose.msra.mxu0 0.0
    %113 = vmatprep.subr.mxu0 0.0
    %114 = vmatpush2.xpose.msra.mxu0 0.0
    %115 = vmatprep.subr.mxu0 0.0
    %116 = vmatpush2.xpose.msra.mxu0 0.0
    %117 = vmatprep.subr.mxu0 0.0
    %118 = vmatpush2.xpose.msra.mxu0 0.0
    %119 = vmatprep.subr.mxu0 0.0
    %120 = vmatpush2.xpose.msra.mxu0 0.0
    %121 = vmatprep.subr.mxu0 0.0
    %122 = vmatpush2.xpose.msra.mxu0 0.0
    %123 = vmatprep.subr.mxu0 0.0
    %124 = vmatpush2.xpose.msra.mxu0 0.0
    %125 = vmatprep.subr.mxu0 0.0
    %126 = vmatpush2.xpose.msra.mxu0 0.0
    %127 = vmatprep.mubr.f32.mxu0 0.0
    %128 = vmatmul.mubr.f32.gmra.mxu0 %v59
    %v129 = vpop.f32.mrf.mxu0
    %v130 = vadd.f32 0.0, %v129
    %v131 = vpop.f32.mrf.mxu0
    %132 = vdwg.mxu0
    %133 = vmatprep.subr.mxu0 0.0
    %134 = vmatpush1.xpose.msra.mxu0 0.0
    %135 = vmatprep.subr.mxu0 0.0
    %136 = vmatpush1.xpose.msra.mxu0 0.0
    %137 = vmatprep.subr.mxu0 0.0
    %138 = vmatpush1.xpose.msra.mxu0 0.0
    %139 = vmatprep.subr.mxu0 0.0
    %140 = vmatpush1.xpose.msra.mxu0 0.0
    %141 = vmatprep.subr.mxu0 0.0
    %142 = vmatpush1.xpose.msra.mxu0 0.0
    %143 = vmatprep.subr.mxu0 0.0
    %144 = vmatpush1.xpose.msra.mxu0 0.0
    %145 = vmatprep.subr.mxu0 0.0
    %146 = vmatpush1.xpose.msra.mxu0 0.0
    %147 = vmatprep.subr.mxu0 0.0
    %148 = vmatpush1.xpose.msra.mxu0 0.0
    %149 = vmatprep.subr.mxu0 0.0
    %150 = vmatpush1.xpose.msra.mxu0 0.0
    %151 = vmatprep.subr.mxu0 0.0
    %152 = vmatpush1.xpose.msra.mxu0 0.0
    %153 = vmatprep.subr.mxu0 0.0
    %154 = vmatpush1.xpose.msra.mxu0 0.0
    %155 = vmatprep.subr.mxu0 0.0
    %156 = vmatpush1.xpose.msra.mxu0 0.0
    %157 = vmatprep.subr.mxu0 0.0
    %158 = vmatpush1.xpose.msra.mxu0 0.0
    %159 = vmatprep.subr.mxu0 0.0
    %160 = vmatpush1.xpose.msra.mxu0 0.0
    %161 = vmatprep.subr.mxu0 0.0
    %162 = vmatpush1.xpose.msra.mxu0 0.0
    %163 = vmatprep.subr.mxu0 0.0
    %164 = vmatpush1.xpose.msra.mxu0 %v62
    %165 = vmatprep.subr.mxu0 0.0
    %166 = vmatpush2.xpose.msra.mxu0 0.0
    %167 = vmatprep.subr.mxu0 0.0
    %168 = vmatpush2.xpose.msra.mxu0 0.0
    %169 = vmatprep.subr.mxu0 0.0
    %170 = vmatpush2.xpose.msra.mxu0 0.0
    %171 = vmatprep.subr.mxu0 0.0
    %172 = vmatpush2.xpose.msra.mxu0 0.0
    %173 = vmatprep.subr.mxu0 0.0
    %174 = vmatpush2.xpose.msra.mxu0 0.0
    %175 = vmatprep.subr.mxu0 0.0
    %176 = vmatpush2.xpose.msra.mxu0 0.0
    %177 = vmatprep.subr.mxu0 0.0
    %178 = vmatpush2.xpose.msra.mxu0 0.0
    %179 = vmatprep.subr.mxu0 0.0
    %180 = vmatpush2.xpose.msra.mxu0 0.0
    %181 = vmatprep.subr.mxu0 0.0
    %182 = vmatpush2.xpose.msra.mxu0 0.0
    %183 = vmatprep.subr.mxu0 0.0
    %184 = vmatpush2.xpose.msra.mxu0 0.0
    %185 = vmatprep.subr.mxu0 0.0
    %186 = vmatpush2.xpose.msra.mxu0 0.0
    %187 = vmatprep.subr.mxu0 0.0
    %188 = vmatpush2.xpose.msra.mxu0 0.0
    %189 = vmatprep.subr.mxu0 0.0
    %190 = vmatpush2.xpose.msra.mxu0 0.0
    %191 = vmatprep.subr.mxu0 0.0
    %192 = vmatpush2.xpose.msra.mxu0 0.0
    %193 = vmatprep.subr.mxu0 0.0
    %194 = vmatpush2.xpose.msra.mxu0 0.0
    %195 = vmatprep.subr.mxu0 0.0
    %196 = vmatpush2.xpose.msra.mxu0 0.0
    %197 = vmatprep.mubr.f32.mxu0 0.0
    %198 = vmatmul.mubr.f32.gmra.mxu0 %v61
    %v199 = vpop.f32.mrf.mxu0
    %v200 = vadd.f32 0.0, %v199
    %v201 = vpop.f32.mrf.mxu0
    %202 = vdwg.mxu0
    %203 = vmatprep.subr.mxu0 0.0
    %204 = vmatpush1.xpose.msra.mxu0 0.0
    %205 = vmatprep.subr.mxu0 0.0
    %206 = vmatpush1.xpose.msra.mxu0 0.0
    %207 = vmatprep.subr.mxu0 0.0
    %208 = vmatpush1.xpose.msra.mxu0 0.0
    %209 = vmatprep.subr.mxu0 0.0
    %210 = vmatpush1.xpose.msra.mxu0 0.0
    %211 = vmatprep.subr.mxu0 0.0
    %212 = vmatpush1.xpose.msra.mxu0 0.0
    %213 = vmatprep.subr.mxu0 0.0
    %214 = vmatpush1.xpose.msra.mxu0 0.0
    %215 = vmatprep.subr.mxu0 0.0
    %216 = vmatpush1.xpose.msra.mxu0 0.0
    %217 = vmatprep.subr.mxu0 0.0
    %218 = vmatpush1.xpose.msra.mxu0 0.0
    %219 = vmatprep.subr.mxu0 0.0
    %220 = vmatpush1.xpose.msra.mxu0 0.0
    %221 = vmatprep.subr.mxu0 0.0
    %222 = vmatpush1.xpose.msra.mxu0 0.0
    %223 = vmatprep.subr.mxu0 0.0
    %224 = vmatpush1.xpose.msra.mxu0 0.0
    %225 = vmatprep.subr.mxu0 0.0
    %226 = vmatpush1.xpose.msra.mxu0 0.0
    %227 = vmatprep.subr.mxu0 0.0
    %228 = vmatpush1.xpose.msra.mxu0 0.0
    %229 = vmatprep.subr.mxu0 0.0
    %230 = vmatpush1.xpose.msra.mxu0 0.0
    %231 = vmatprep.subr.mxu0 0.0
    %232 = vmatpush1.xpose.msra.mxu0 0.0
    %233 = vmatprep.subr.mxu0 0.0
    %234 = vmatpush1.xpose.msra.mxu0 %v62
    %235 = vmatprep.subr.mxu0 0.0
    %236 = vmatpush2.xpose.msra.mxu0 0.0
    %237 = vmatprep.subr.mxu0 0.0
    %238 = vmatpush2.xpose.msra.mxu0 0.0
    %239 = vmatprep.subr.mxu0 0.0
    %240 = vmatpush2.xpose.msra.mxu0 0.0
    %241 = vmatprep.subr.mxu0 0.0
    %242 = vmatpush2.xpose.msra.mxu0 0.0
    %243 = vmatprep.subr.mxu0 0.0
    %244 = vmatpush2.xpose.msra.mxu0 0.0
    %245 = vmatprep.subr.mxu0 0.0
    %246 = vmatpush2.xpose.msra.mxu0 0.0
    %247 = vmatprep.subr.mxu0 0.0
    %248 = vmatpush2.xpose.msra.mxu0 0.0
    %249 = vmatprep.subr.mxu0 0.0
    %250 = vmatpush2.xpose.msra.mxu0 0.0
    %251 = vmatprep.subr.mxu0 0.0
    %252 = vmatpush2.xpose.msra.mxu0 0.0
    %253 = vmatprep.subr.mxu0 0.0
    %254 = vmatpush2.xpose.msra.mxu0 0.0
    %255 = vmatprep.subr.mxu0 0.0
    %256 = vmatpush2.xpose.msra.mxu0 0.0
    %257 = vmatprep.subr.mxu0 0.0
    %258 = vmatpush2.xpose.msra.mxu0 0.0
    %259 = vmatprep.subr.mxu0 0.0
    %260 = vmatpush2.xpose.msra.mxu0 0.0
    %261 = vmatprep.subr.mxu0 0.0
    %262 = vmatpush2.xpose.msra.mxu0 0.0
    %263 = vmatprep.subr.mxu0 0.0
    %264 = vmatpush2.xpose.msra.mxu0 0.0
    %265 = vmatprep.subr.mxu0 0.0
    %266 = vmatpush2.xpose.msra.mxu0 0.0
    %267 = vmatprep.mubr.f32.mxu0 0.0
    %268 = vmatmul.mubr.f32.gmra.mxu0 %v59
    %v269 = vpop.f32.mrf.mxu0
    %v270 = vadd.f32 0.0, %v269
    %v271 = vpop.f32.mrf.mxu0
    %272 = vdwg.mxu0
    %v273 = vld [vmem:[%s6] sm:$0xff]
    %v274 = vld [vmem:[%s7] sm:$0xff]
    %v275 = vld [vmem:[%s8] sm:$0x1]
    %v276 = vld [vmem:[%s9] sm:$0x1]
    %278 = vset.pattern.permute.xlu0 0
    %279 = vperm.xlu0 %278, %v273
    %v280 = vpop.permute.xlu0 %279
    %v283 = vlaneseq
    %v284 = vshrl.u32 %v283, 7
    %v285 = vsub.s32 0, %v284
    %v286 = vrot.slane %v275, %v285
    %v288 = vadd.f32 %v280, %v286
    %v289 = vmul.f32 %v130, 2.0
    %v290 = vsub.f32 %v288, %v289
    %v291 = vstv %s57
    %v292 = vmul.f32 %v291, %v290
    %v293 = vmul.f32 %v292, 1.442695
    %v294 = vpow.pop %v293
    %296 = vset.pattern.permute.xlu0 0
    %297 = vperm.xlu0 %296, %v274
    %v298 = vpop.permute.xlu0 %297
    %v301 = vlaneseq
    %v302 = vshrl.u32 %v301, 7
    %v303 = vsub.s32 0, %v302
    %v304 = vrot.slane %v276, %v303
    %v306 = vadd.f32 %v298, %v304
    %v307 = vmul.f32 %v200, 2.0
    %v308 = vsub.f32 %v306, %v307
    %v309 = vmul.f32 %v291, %v308
    %v310 = vmul.f32 %v309, 1.442695
    %v311 = vpow.pop %v310
    %v312 = vadd.f32 %v280, %v304
    %v313 = vmul.f32 %v270, 2.0
    %v314 = vsub.f32 %v312, %v313
    %v315 = vmul.f32 %v291, %v314
    %v316 = vmul.f32 %v315, 1.442695
    %v317 = vpow.pop %v316
    %v318 = vadd.f32 %v294, %v311
    %v319 = vmul.f32 %v317, 2.0
    %v320 = vsub.f32 %v318, %v319
    %s321 = smul.u32 0, 8
    %v322 = vlaneseq
    %v323 = vshrl.u32 %v322, 7
    %v324 = vstv %s321
    %v325 = vadd.s32 %v324, %v323
    %s326 = smul.u32 0, 8
    %v327 = vlaneseq
    %v328 = vand.u32 %v327, 127
    %v329 = vstv %s326
    %v330 = vadd.s32 %v329, %v328
    %v331 = vstv %s58
    %vm332 = vcmp.lt.s32.totalorder %v325, %v331
    %vm333 = vcmp.lt.s32.totalorder %v330, %v331
    %vm334 = vmand %vm332, %vm333
    %v335 = vsel %vm334, %v320, 0.0
    %v336 = vld [vmem:[#allocation2] sm:$0x1]
    %vm337 = vcmask 64512
    %v338 = vsel %vm337, %v335, 0.0
    %v339 = vrot.slane %v338, 4
    %v340 = vadd.f32 %v338, %v339
    %v341 = vrot.slane %v340, 2
    %v342 = vadd.f32 %v340, %v341
    %v343 = vrot.slane %v342, 1
    %v344 = vadd.f32 %v342, %v343
    %v345 = vadd.f32 %v336, %v344
    %vm346 = vcmask 57344
    %347 = vst.msk [vmem:[#allocation2] sm:$0x1] %vm346, %v345
    // Predicated region
    $region50: #{tpu_custom_call.1} parent=1 // pred_check
      %p348 = pneg %p50
    $region51: #{tpu_custom_call.1} parent=1 // pred_check_branch
      %350 = sbr.rel (%p348) target = $region53
    $region52: #{tpu_custom_call.1} parent=1 // pred_region
      %v351 = vld [vmem:[#allocation2] sm:$0x1]
      %352 = vst.msk [vmem:[#allocation8] sm:$0x1] %vm346, %v351
    $region53: #{tpu_custom_call.1} parent=1 // pred_fallthru
      _
    // Predicated region
    $region54: #{tpu_custom_call.1} parent=1 // pred_check
      _
    $region55: #{tpu_custom_call.1} parent=1 // pred_check_branch
      %354 = sbr.rel (0) target = $region57
    $region56: #{tpu_custom_call.1} parent=1 // pred_region
      %s356 = ssub.s32 16, 16
      %357 = vsyncadd [#allocation7], %s356
      %s359 = sshll.u32 [#allocation8], 4
      %s360 = int_to_ptr.vmem [resolvable:$true] %s359
      %362 = dma.vmem_to_hbm [thread:$0]  %s360, 16, %s10, [#allocation7]
    $region57: #{tpu_custom_call.1} parent=1 // pred_fallthru
      _
    // Predicated region
    $region58: #{tpu_custom_call.1} parent=1 // pred_check
      _
    $region59: #{tpu_custom_call.1} parent=1 // pred_check_branch
      %364 = sbr.rel (0) target = $region61
    $region60: #{tpu_custom_call.1} parent=1 // pred_region
      %365 = dma.done [#allocation7], 16
    $region61: #{tpu_custom_call.1} parent=1 // pred_fallthru
      _
    %366 = vsyncpa [#allocation6], 1
    %367 = vsyncpa [#allocation7], 1

</llo_original>
